<compile_context>
chip_gen: v7x
topology: tpu7x:2x2x1
jax: 0.10.0
libtpu: 0.0.40
codegen_flags: <defaults>
</compile_context>

<pallas_src>
import jax
import jax.numpy as jnp
from jax.experimental import pallas as pl
from jax.experimental.pallas import tpu as pltpu


def _round_up(x, m):
    return ((x + m - 1) // m) * m


def _score_partial_kernel(z_ref, w1_ref, b1_ref, out_ref):
    """Per-tile partial sums of tanh(Linear1(z)) over the tile's rows.

    z_ref  : (tn, M*D)    lane-dense node tile
    w1_ref : (M*D, M*H)   block-diagonal Linear1 weight (one w1 block / metapath)
    b1_ref : (1, M*H)     Linear1 bias, tiled M times
    out_ref: (1, 1, M*H)  sum over the tile's rows of tanh(z @ W1 + b1)
    """
    a = jnp.dot(z_ref[...], w1_ref[...], preferred_element_type=jnp.float32)
    a = jnp.tanh(a + b1_ref[...])                               # EUP
    out_ref[...] = jnp.sum(a, axis=0, keepdims=True)[None]      # (1, 1, M*H)


def _weighted_sum_kernel(z_ref, bmat_ref, out_ref):
    """out_tile = z_tile @ B, where B folds beta and the metapath reduction."""
    out_ref[...] = jnp.dot(z_ref[...], bmat_ref[...],
                           preferred_element_type=jnp.float32
                           ).astype(out_ref.dtype)


def semantic_attention(z, w1, b1, w2, *, tn=None):
    """z: (N, M, D) f32; w1: (D, H); b1: (H,); w2: (H, 1). Returns (N, D)."""
    N, M, D = z.shape
    Din, H = w1.shape
    assert Din == D, "w1 must be (in_size, hidden_size)"
    MD, MH = M * D, M * H
    f32 = jnp.float32

    # Lane-dense layout: metapath and feature dims collapsed onto lanes.
    z_flat = z.reshape(N, MD)

    # ---- N-tile size: big tiles to amortize per-step overhead, sized so the
    # z block + the (tn, M*H) activation + double-buffering stay comfortably
    # under the default scoped-VMEM limit on every generation.
    if tn is None:
        row_bytes = 4 * max(MD, MH)
        target_rows = max(8, (2 * 1024 * 1024) // row_bytes)    # ~2 MiB live rows
        tn = min(target_rows, 1024, _round_up(N, 8))
        tn = max(8, (tn // 8) * 8)
    num_tiles = pl.cdiv(N, tn)
    Np = num_tiles * tn
    pad = Np - N
    if pad:
        z_flat = jnp.pad(z_flat, ((0, pad), (0, 0)))

    # Block-diagonal Linear1 so a single (tn, M*D) @ (M*D, M*H) MXU matmul
    # projects every metapath at once (no in-kernel reshapes); bias tiled to
    # match its column layout (col m*H + h -> b1[h]).
    w1_big = jnp.kron(jnp.eye(M, dtype=f32), w1.astype(f32))     # (M*D, M*H)
    b1_big = jnp.tile(b1.astype(f32).reshape(1, H), (1, M))      # (1, M*H)

    # ---- Pass 1: per-tile partial activation sums (parallel -> both TCs on v7x)
    partials = pl.pallas_call(
        _score_partial_kernel,
        out_shape=jax.ShapeDtypeStruct((num_tiles, 1, MH), jnp.float32),
        grid_spec=pltpu.PrefetchScalarGridSpec(
            num_scalar_prefetch=0,
            grid=(num_tiles,),
            in_specs=[
                pl.BlockSpec((tn, MD), lambda i: (i, 0)),
                pl.BlockSpec((MD, MH), lambda i: (0, 0)),
                pl.BlockSpec((1, MH), lambda i: (0, 0)),
            ],
            out_specs=pl.BlockSpec((1, 1, MH), lambda i: (i, 0, 0)),
        ),
        compiler_params=pltpu.CompilerParams(
            dimension_semantics=("parallel",)),
    )(z_flat, w1_big, b1_big)

    # ---- Tiny epilogue in plain JAX (O(M*H), not per grid step):
    # remove the padded-row contributions (each pad row adds exactly tanh(b1)),
    # apply Linear2 (w2), the mean over N, and the softmax over M.
    colsum = partials.reshape(num_tiles, MH).sum(axis=0)         # (M*H,)
    if pad:
        colsum = colsum - jnp.float32(pad) * jnp.tanh(b1_big.reshape(MH))
    wmean = (colsum.reshape(M, H) @ w2.astype(f32).reshape(H)) / jnp.float32(N)
    beta = jax.nn.softmax(wmean)                                 # (M,)

    # B[m*D + d, d'] = beta[m] * delta(d, d')  -> out = z_flat @ B
    bmat = jnp.kron(beta.reshape(M, 1), jnp.eye(D, dtype=f32))   # (M*D, D)

    # ---- Pass 2: beta-weighted reduction over metapaths as one matmul per tile
    out = pl.pallas_call(
        _weighted_sum_kernel,
        out_shape=jax.ShapeDtypeStruct((Np, D), z.dtype),
        grid_spec=pltpu.PrefetchScalarGridSpec(
            num_scalar_prefetch=0,
            grid=(num_tiles,),
            in_specs=[
                pl.BlockSpec((tn, MD), lambda i: (i, 0)),
                pl.BlockSpec((MD, D), lambda i: (0, 0)),
            ],
            out_specs=pl.BlockSpec((tn, D), lambda i: (i, 0)),
        ),
        compiler_params=pltpu.CompilerParams(
            dimension_semantics=("parallel",)),
    )(z_flat, bmat)

    return out[:N] if pad else out


def semantic_attention_ref(z, w1, b1, w2):
    """Pure-JAX reference mirroring the PyTorch module."""
    w = jnp.tanh(z @ w1 + b1) @ w2           # (N, M, 1)
    w = w.mean(0)                            # (M, 1)
    beta = jax.nn.softmax(w, axis=0)         # (M, 1)
    beta = jnp.broadcast_to(beta, (z.shape[0],) + beta.shape)  # (N, M, 1)
    return (beta * z).sum(1)                 # (N, D)


if __name__ == "__main__":
    # Small, module-consistent shapes: N nodes, M metapaths, in_size D,
    # hidden_size H (module default hidden_size=128).
    N, M, D, H = 64, 4, 32, 128

    key = jax.random.PRNGKey(0)
    kz, k1, kb, k2 = jax.random.split(key, 4)
    z = jax.random.normal(kz, (N, M, D), dtype=jnp.float32)
    # Deterministic "Linear" parameters (uniform-ish scale like PyTorch init).
    w1 = jax.random.uniform(k1, (D, H), jnp.float32, -1.0, 1.0) / jnp.sqrt(D)
    b1 = jax.random.uniform(kb, (H,), jnp.float32, -1.0, 1.0) / jnp.sqrt(D)
    w2 = jax.random.uniform(k2, (H, 1), jnp.float32, -1.0, 1.0) / jnp.sqrt(H)

    out = jax.block_until_ready(semantic_attention(z, w1, b1, w2))

    ref = semantic_attention_ref(z, w1, b1, w2)
    assert out.shape == (N, D)
    assert jnp.allclose(out, ref, atol=1e-5, rtol=1e-5), "mismatch vs reference"

    print("KERNEL_OK")
</pallas_src>

<mosaic_0001>
module attributes {stable_mosaic.version = 11 : i64} {
  func.func @_score_partial_kernel(%arg0: i32, %arg1: memref<64x128xf32, #tpu.memory_space<vmem>>, %arg2: memref<128x512xf32, #tpu.memory_space<vmem>>, %arg3: memref<1x512xf32, #tpu.memory_space<vmem>>, %arg4: memref<1x1x512xf32, #tpu.memory_space<vmem>>) attributes {dimension_semantics = [#tpu.dimension_semantics<parallel>], iteration_bounds = array<i64: 1>, scalar_prefetch = 0 : i64, scratch_operands = 0 : i64, tpu.core_type = #tpu.core_type<tc>, window_params = [{transform_indices = @transform_0, window_bounds = array<i64: 64, 128>}, {pipeline_mode = #tpu.pipeline_mode<synchronous>, transform_indices = @transform_1, window_bounds = array<i64: 128, 512>}, {pipeline_mode = #tpu.pipeline_mode<synchronous>, transform_indices = @transform_2, window_bounds = array<i64: 1, 512>}, {transform_indices = @transform_3, window_bounds = array<i64: 1, 1, 512>}]} {
    %c0 = arith.constant 0 : index
    %c0_0 = arith.constant 0 : index
    %0 = vector.load %arg1[%c0, %c0_0] : memref<64x128xf32, #tpu.memory_space<vmem>>, vector<64x128xf32>
    %c0_1 = arith.constant 0 : index
    %c0_2 = arith.constant 0 : index
    %1 = vector.load %arg2[%c0_1, %c0_2] : memref<128x512xf32, #tpu.memory_space<vmem>>, vector<128x512xf32>
    %cst = arith.constant dense<0.000000e+00> : vector<64x512xf32>
    %2 = tpu.matmul %0, %1, %cst {dimension_numbers = #tpu.dot_dimension_numbers<[1], [0], [0], [1], [0, 0, 1, 1], [], []>} : vector<64x128xf32>, vector<128x512xf32>, vector<64x512xf32> -> vector<64x512xf32>
    %c0_3 = arith.constant 0 : index
    %c0_4 = arith.constant 0 : index
    %3 = vector.load %arg3[%c0_3, %c0_4] : memref<1x512xf32, #tpu.memory_space<vmem>>, vector<1x512xf32>
    %4 = vector.broadcast %3 : vector<1x512xf32> to vector<64x512xf32>
    %5 = arith.addf %2, %4 : vector<64x512xf32>
    %6 = math.tanh %5 : vector<64x512xf32>
    %cst_5 = arith.constant dense<0.000000e+00> : vector<512xf32>
    %7 = vector.multi_reduction <add>, %6, %cst_5 [0] : vector<64x512xf32> to vector<512xf32>
    %8 = vector.shape_cast %7 : vector<512xf32> to vector<1x512xf32>
    %9 = vector.shape_cast %8 : vector<1x512xf32> to vector<1x1x512xf32>
    %c0_6 = arith.constant 0 : index
    %c0_7 = arith.constant 0 : index
    %c0_8 = arith.constant 0 : index
    %10 = vector.load %arg4[%c0_6, %c0_7, %c0_8] : memref<1x1x512xf32, #tpu.memory_space<vmem>>, vector<1x1x512xf32>
    tpu.vector_store %arg4[%c0_6, %c0_7, %c0_8], %9 {strides = array<i32>} : memref<1x1x512xf32, #tpu.memory_space<vmem>>, vector<1x1x512xf32>,
    return
  }
  func.func @transform_0(%arg0: i32) -> (i32, i32) {
    %c0_i32 = arith.constant 0 : i32
    %c0_i32_0 = arith.constant 0 : i32
    return %arg0, %c0_i32 : i32, i32
  }
  func.func @transform_1(%arg0: i32) -> (i32, i32) {
    %c0_i32 = arith.constant 0 : i32
    %c0_i32_0 = arith.constant 0 : i32
    %c0_i32_1 = arith.constant 0 : i32
    return %c0_i32, %c0_i32_0 : i32, i32
  }
  func.func @transform_2(%arg0: i32) -> (i32, i32) {
    %c0_i32 = arith.constant 0 : i32
    %c0_i32_0 = arith.constant 0 : i32
    %c0_i32_1 = arith.constant 0 : i32
    return %c0_i32, %c0_i32_0 : i32, i32
  }
  func.func @transform_3(%arg0: i32) -> (i32, i32, i32) {
    %c0_i32 = arith.constant 0 : i32
    %c0_i32_0 = arith.constant 0 : i32
    %c0_i32_1 = arith.constant 0 : i32
    return %arg0, %c0_i32, %c0_i32_0 : i32, i32, i32
  }
}

</mosaic_0001>

<llo_original>
// kernel: tpu_custom_call.1
$region0: #{tpu_custom_call.1}
  #allocation0 [shape = 'u32[]', space=smem, size = 0x4, offset = 0x4, fixed_abs, tag = 'smem constant byte address 0x4 - core index']
  #allocation1 [shape = 'u32[144,128]{1,0:T(1,128)}', space=vmem, size = 0x12000, scoped, tag = 'internal scratch']
  %s0 = inlined_call_operand.hbm [shape: f32[64,128], index: 0, kind: input, shape index: {}]
  %s1 = inlined_call_operand.hbm [shape: f32[128,512], index: 1, kind: input, shape index: {}]
  %s2 = inlined_call_operand.vmem [shape: f32[1,512], index: 2, kind: input, shape index: {}]
  %s3 = inlined_call_operand.hbm [shape: f32[1,1,512], index: 3, kind: output, shape index: {}]
  %s4 = sld [smem:[#allocation0]]
  $region30: #{tpu_custom_call.1} parent=0
    _
  %s6 = ssub.s32 1, %s4
  %s7 = scalar_select 0, %s6, %s4
  $region1: #{tpu_custom_call.1} parent=0
    #allocation2 [shape = 'u8[32768]{0}', space=vmem, size = 0x8000, scoped, tag = 'input window, operand 0, single buffered']
    #allocation3 [shape = 's32[1]{0}', space=sflag, size = 0x4, scoped, tag = 'scoped memory for tpu_custom_call.1']
    #allocation4 [shape = 's32[1]{0}', space=sflag, size = 0x4, scoped, tag = 'scoped memory for tpu_custom_call.1']
    #allocation5 [shape = 'u8[262144]{0}', space=vmem, size = 0x40000, scoped, tag = 'input window, operand 1, single buffered']
    #allocation6 [shape = 's32[1]{0}', space=sflag, size = 0x4, scoped, tag = 'scoped memory for tpu_custom_call.1']
    #allocation7 [shape = 'u8[2048]{0}', space=vmem, size = 0x800, scoped, tag = 'output window, operand 0, single buffered']
    %8 = vsyncpa [#allocation3], 0
    %9 = vsyncpa [#allocation6], 0
    %10 = vsyncpa [#allocation4], 0
    // Predicated region
    $region2: #{tpu_custom_call.1} parent=1 // pred_check
      _
    $region3: #{tpu_custom_call.1} parent=1 // pred_check_branch
      %12 = sbr.rel (0) target = $region5
    $region4: #{tpu_custom_call.1} parent=1 // pred_region
      %s14 = ssub.s32 1024, 1024
      %15 = vsyncadd [#allocation3], %s14
      %s16 = sshll.u32 [#allocation2], 4
      %s17 = int_to_ptr.vmem [resolvable:$true] %s16
      %22 = dma.hbm_to_vmem [thread:$0]  %s0, 1024, %s17, [#allocation3], 128, 128, 8
    $region5: #{tpu_custom_call.1} parent=1 // pred_fallthru
      _
    // Predicated region
    $region6: #{tpu_custom_call.1} parent=1 // pred_check
      _
    $region7: #{tpu_custom_call.1} parent=1 // pred_check_branch
      %24 = sbr.rel (0) target = $region9
    $region8: #{tpu_custom_call.1} parent=1 // pred_region
      %s26 = ssub.s32 8192, 8192
      %27 = vsyncadd [#allocation6], %s26
      %s28 = sshll.u32 [#allocation5], 4
      %s29 = int_to_ptr.vmem [resolvable:$true] %s28
      %34 = dma.hbm_to_vmem [thread:$0]  %s1, 8192, %s29, [#allocation6], 512, 512, 32
    $region9: #{tpu_custom_call.1} parent=1 // pred_fallthru
      _
    // Predicated region
    $region10: #{tpu_custom_call.1} parent=1 // pred_check
      _
    $region11: #{tpu_custom_call.1} parent=1 // pred_check_branch
      %36 = sbr.rel (0) target = $region13
    $region12: #{tpu_custom_call.1} parent=1 // pred_region
      _
    $region13: #{tpu_custom_call.1} parent=1 // pred_fallthru
      _
    // Predicated region
    $region14: #{tpu_custom_call.1} parent=1 // pred_check
      _
    $region15: #{tpu_custom_call.1} parent=1 // pred_check_branch
      %38 = sbr.rel (0) target = $region17
    $region16: #{tpu_custom_call.1} parent=1 // pred_region
      %39 = dma.done [#allocation3], 1024
    $region17: #{tpu_custom_call.1} parent=1 // pred_fallthru
      _
    // Predicated region
    $region18: #{tpu_custom_call.1} parent=1 // pred_check
      _
    $region19: #{tpu_custom_call.1} parent=1 // pred_check_branch
      %41 = sbr.rel (0) target = $region21
    $region20: #{tpu_custom_call.1} parent=1 // pred_region
      %42 = dma.done [#allocation6], 8192
    $region21: #{tpu_custom_call.1} parent=1 // pred_fallthru
      _
    %v43 = vld [vmem:[#allocation2] sm:$0xff]
    %v44 = vld [vmem:[#allocation2 + $0x8] sm:$0xff]
    %v45 = vld [vmem:[#allocation2 + $0x10] sm:$0xff]
    %v46 = vld [vmem:[#allocation2 + $0x18] sm:$0xff]
    %v47 = vld [vmem:[#allocation2 + $0x20] sm:$0xff]
    %v48 = vld [vmem:[#allocation2 + $0x28] sm:$0xff]
    %v49 = vld [vmem:[#allocation2 + $0x30] sm:$0xff]
    %v50 = vld [vmem:[#allocation2 + $0x38] sm:$0xff]
    %v51 = vld [vmem:[#allocation5] sm:$0xff]
    %v52 = vld [vmem:[#allocation5 + $0x8] sm:$0xff]
    %v53 = vld [vmem:[#allocation5 + $0x10] sm:$0xff]
    %v54 = vld [vmem:[#allocation5 + $0x18] sm:$0xff]
    %v55 = vld [vmem:[#allocation5 + $0x20] sm:$0xff]
    %v56 = vld [vmem:[#allocation5 + $0x28] sm:$0xff]
    %v57 = vld [vmem:[#allocation5 + $0x30] sm:$0xff]
    %v58 = vld [vmem:[#allocation5 + $0x38] sm:$0xff]
    %v59 = vld [vmem:[#allocation5 + $0x40] sm:$0xff]
    %v60 = vld [vmem:[#allocation5 + $0x48] sm:$0xff]
    %v61 = vld [vmem:[#allocation5 + $0x50] sm:$0xff]
    %v62 = vld [vmem:[#allocation5 + $0x58] sm:$0xff]
    %v63 = vld [vmem:[#allocation5 + $0x60] sm:$0xff]
    %v64 = vld [vmem:[#allocation5 + $0x68] sm:$0xff]
    %v65 = vld [vmem:[#allocation5 + $0x70] sm:$0xff]
    %v66 = vld [vmem:[#allocation5 + $0x78] sm:$0xff]
    %v67 = vld [vmem:[#allocation5 + $0x80] sm:$0xff]
    %v68 = vld [vmem:[#allocation5 + $0x88] sm:$0xff]
    %v69 = vld [vmem:[#allocation5 + $0x90] sm:$0xff]
    %v70 = vld [vmem:[#allocation5 + $0x98] sm:$0xff]
    %v71 = vld [vmem:[#allocation5 + $0xa0] sm:$0xff]
    %v72 = vld [vmem:[#allocation5 + $0xa8] sm:$0xff]
    %v73 = vld [vmem:[#allocation5 + $0xb0] sm:$0xff]
    %v74 = vld [vmem:[#allocation5 + $0xb8] sm:$0xff]
    %v75 = vld [vmem:[#allocation5 + $0xc0] sm:$0xff]
    %v76 = vld [vmem:[#allocation5 + $0xc8] sm:$0xff]
    %v77 = vld [vmem:[#allocation5 + $0xd0] sm:$0xff]
    %v78 = vld [vmem:[#allocation5 + $0xd8] sm:$0xff]
    %v79 = vld [vmem:[#allocation5 + $0xe0] sm:$0xff]
    %v80 = vld [vmem:[#allocation5 + $0xe8] sm:$0xff]
    %v81 = vld [vmem:[#allocation5 + $0xf0] sm:$0xff]
    %v82 = vld [vmem:[#allocation5 + $0xf8] sm:$0xff]
    %v83 = vld [vmem:[#allocation5 + $0x100] sm:$0xff]
    %v84 = vld [vmem:[#allocation5 + $0x108] sm:$0xff]
    %v85 = vld [vmem:[#allocation5 + $0x110] sm:$0xff]
    %v86 = vld [vmem:[#allocation5 + $0x118] sm:$0xff]
    %v87 = vld [vmem:[#allocation5 + $0x120] sm:$0xff]
    %v88 = vld [vmem:[#allocation5 + $0x128] sm:$0xff]
    %v89 = vld [vmem:[#allocation5 + $0x130] sm:$0xff]
    %v90 = vld [vmem:[#allocation5 + $0x138] sm:$0xff]
    %v91 = vld [vmem:[#allocation5 + $0x140] sm:$0xff]
    %v92 = vld [vmem:[#allocation5 + $0x148] sm:$0xff]
    %v93 = vld [vmem:[#allocation5 + $0x150] sm:$0xff]
    %v94 = vld [vmem:[#allocation5 + $0x158] sm:$0xff]
    %v95 = vld [vmem:[#allocation5 + $0x160] sm:$0xff]
    %v96 = vld [vmem:[#allocation5 + $0x168] sm:$0xff]
    %v97 = vld [vmem:[#allocation5 + $0x170] sm:$0xff]
    %v98 = vld [vmem:[#allocation5 + $0x178] sm:$0xff]
    %v99 = vld [vmem:[#allocation5 + $0x180] sm:$0xff]
    %v100 = vld [vmem:[#allocation5 + $0x188] sm:$0xff]
    %v101 = vld [vmem:[#allocation5 + $0x190] sm:$0xff]
    %v102 = vld [vmem:[#allocation5 + $0x198] sm:$0xff]
    %v103 = vld [vmem:[#allocation5 + $0x1a0] sm:$0xff]
    %v104 = vld [vmem:[#allocation5 + $0x1a8] sm:$0xff]
    %v105 = vld [vmem:[#allocation5 + $0x1b0] sm:$0xff]
    %v106 = vld [vmem:[#allocation5 + $0x1b8] sm:$0xff]
    %v107 = vld [vmem:[#allocation5 + $0x1c0] sm:$0xff]
    %v108 = vld [vmem:[#allocation5 + $0x1c8] sm:$0xff]
    %v109 = vld [vmem:[#allocation5 + $0x1d0] sm:$0xff]
    %v110 = vld [vmem:[#allocation5 + $0x1d8] sm:$0xff]
    %v111 = vld [vmem:[#allocation5 + $0x1e0] sm:$0xff]
    %v112 = vld [vmem:[#allocation5 + $0x1e8] sm:$0xff]
    %v113 = vld [vmem:[#allocation5 + $0x1f0] sm:$0xff]
    %v114 = vld [vmem:[#allocation5 + $0x1f8] sm:$0xff]
    %v115 = vld [vmem:[%s2] sm:$0xf]
    %v117 = vlaneseq
    %v118 = vshrl.u32 %v117, 7
    %v119 = vsub.s32 0, %v118
    %v120 = vrot.slane %v115, %v119
    %v121 = vlaneseq
    %v122 = vshrl.u32 %v121, 7
    %v123 = vsub.s32 1, %v122
    %v124 = vrot.slane %v115, %v123
    %v125 = vlaneseq
    %v126 = vshrl.u32 %v125, 7
    %v127 = vsub.s32 2, %v126
    %v128 = vrot.slane %v115, %v127
    %v129 = vlaneseq
    %v130 = vshrl.u32 %v129, 7
    %v131 = vsub.s32 3, %v130
    %v132 = vrot.slane %v115, %v131
    %137 = vmatprep.subr.mxu0 %v52
    %138 = vmatpush1.msra.mxu0 %v51
    %139 = vmatprep.subr.mxu0 %v56
    %140 = vmatpush1.msra.mxu0 %v55
    %141 = vmatprep.subr.mxu0 %v60
    %142 = vmatpush1.msra.mxu0 %v59
    %143 = vmatprep.subr.mxu0 %v64
    %144 = vmatpush1.msra.mxu0 %v63
    %145 = vmatprep.subr.mxu0 %v68
    %146 = vmatpush1.msra.mxu0 %v67
    %147 = vmatprep.subr.mxu0 %v72
    %148 = vmatpush1.msra.mxu0 %v71
    %149 = vmatprep.subr.mxu0 %v76
    %150 = vmatpush1.msra.mxu0 %v75
    %151 = vmatprep.subr.mxu0 %v80
    %152 = vmatpush1.msra.mxu0 %v79
    %153 = vmatprep.subr.mxu0 %v84
    %154 = vmatpush1.msra.mxu0 %v83
    %155 = vmatprep.subr.mxu0 %v88
    %156 = vmatpush1.msra.mxu0 %v87
    %157 = vmatprep.subr.mxu0 %v92
    %158 = vmatpush1.msra.mxu0 %v91
    %159 = vmatprep.subr.mxu0 %v96
    %160 = vmatpush1.msra.mxu0 %v95
    %161 = vmatprep.subr.mxu0 %v100
    %162 = vmatpush1.msra.mxu0 %v99
    %163 = vmatprep.subr.mxu0 %v104
    %164 = vmatpush1.msra.mxu0 %v103
    %165 = vmatprep.subr.mxu0 %v108
    %166 = vmatpush1.msra.mxu0 %v107
    %167 = vmatprep.subr.mxu0 %v112
    %168 = vmatpush1.msra.mxu0 %v111
    %169 = vmatprep.subr.mxu0 0.0
    %170 = vmatpush1.msra.mxu0 0.0
    %171 = vmatprep.subr.mxu0 0.0
    %172 = vmatpush1.msra.mxu0 0.0
    %173 = vmatprep.subr.mxu0 0.0
    %174 = vmatpush1.msra.mxu0 0.0
    %175 = vmatprep.subr.mxu0 0.0
    %176 = vmatpush1.msra.mxu0 0.0
    %177 = vmatprep.subr.mxu0 0.0
    %178 = vmatpush1.msra.mxu0 0.0
    %179 = vmatprep.subr.mxu0 0.0
    %180 = vmatpush1.msra.mxu0 0.0
    %181 = vmatprep.subr.mxu0 0.0
    %182 = vmatpush1.msra.mxu0 0.0
    %183 = vmatprep.subr.mxu0 0.0
    %184 = vmatpush1.msra.mxu0 0.0
    %185 = vmatprep.subr.mxu0 0.0
    %186 = vmatpush1.msra.mxu0 0.0
    %187 = vmatprep.subr.mxu0 0.0
    %188 = vmatpush1.msra.mxu0 0.0
    %189 = vmatprep.subr.mxu0 0.0
    %190 = vmatpush1.msra.mxu0 0.0
    %191 = vmatprep.subr.mxu0 0.0
    %192 = vmatpush1.msra.mxu0 0.0
    %193 = vmatprep.subr.mxu0 0.0
    %194 = vmatpush1.msra.mxu0 0.0
    %195 = vmatprep.subr.mxu0 0.0
    %196 = vmatpush1.msra.mxu0 0.0
    %197 = vmatprep.subr.mxu0 0.0
    %198 = vmatpush1.msra.mxu0 0.0
    %199 = vmatprep.subr.mxu0 0.0
    %200 = vmatpush1.msra.mxu0 0.0
    %201 = vmatprep.mubr.f32.mxu0 0.0
    %202 = vmatmul.mubr.f32.gmra.mrb[0].mxu0 %v43
    %v203 = vpop.f32.mrb[0].mxu0
    %v204 = vadd.f32 %v120, %v203
    %v205 = vpop.f32.mrb[0].mxu0
    %v206 = vadd.f32 %v124, %v205
    %207 = vmatprep.mubr.f32.mxu0 0.0
    %208 = vmatmul.mubr.f32.gmra.mrb[0].mxu0 %v44
    %v209 = vpop.f32.mrb[0].mxu0
    %v210 = vadd.f32 %v120, %v209
    %v211 = vpop.f32.mrb[0].mxu0
    %v212 = vadd.f32 %v124, %v211
    %213 = vmatprep.mubr.f32.mxu0 0.0
    %214 = vmatmul.mubr.f32.gmra.mrb[0].mxu0 %v45
    %v215 = vpop.f32.mrb[0].mxu0
    %v216 = vadd.f32 %v120, %v215
    %v217 = vpop.f32.mrb[0].mxu0
    %v218 = vadd.f32 %v124, %v217
    %219 = vmatprep.mubr.f32.mxu0 0.0
    %220 = vmatmul.mubr.f32.gmra.mrb[0].mxu0 %v46
    %v221 = vpop.f32.mrb[0].mxu0
    %v222 = vadd.f32 %v120, %v221
    %v223 = vpop.f32.mrb[0].mxu0
    %v224 = vadd.f32 %v124, %v223
    %225 = vmatprep.mubr.f32.mxu0 0.0
    %226 = vmatmul.mubr.f32.gmra.mrb[0].mxu0 %v47
    %v227 = vpop.f32.mrb[0].mxu0
    %v228 = vadd.f32 %v120, %v227
    %v229 = vpop.f32.mrb[0].mxu0
    %v230 = vadd.f32 %v124, %v229
    %231 = vmatprep.mubr.f32.mxu0 0.0
    %232 = vmatmul.mubr.f32.gmra.mrb[0].mxu0 %v48
    %v233 = vpop.f32.mrb[0].mxu0
    %v234 = vadd.f32 %v120, %v233
    %v235 = vpop.f32.mrb[0].mxu0
    %v236 = vadd.f32 %v124, %v235
    %237 = vmatprep.mubr.f32.mxu0 0.0
    %238 = vmatmul.mubr.f32.gmra.mrb[0].mxu0 %v49
    %v239 = vpop.f32.mrb[0].mxu0
    %v240 = vadd.f32 %v120, %v239
    %v241 = vpop.f32.mrb[0].mxu0
    %v242 = vadd.f32 %v124, %v241
    %243 = vmatprep.mubr.f32.mxu0 0.0
    %244 = vmatmul.mubr.f32.gmra.mrb[0].mxu0 %v50
    %v245 = vpop.f32.mrb[0].mxu0
    %v246 = vadd.f32 %v120, %v245
    %v247 = vpop.f32.mrb[0].mxu0
    %v248 = vadd.f32 %v124, %v247
    %249 = vdwg.mxu0
    %250 = vmatprep.subr.mxu0 %v54
    %251 = vmatpush1.msra.mxu0 %v53
    %252 = vmatprep.subr.mxu0 %v58
    %253 = vmatpush1.msra.mxu0 %v57
    %254 = vmatprep.subr.mxu0 %v62
    %255 = vmatpush1.msra.mxu0 %v61
    %256 = vmatprep.subr.mxu0 %v66
    %257 = vmatpush1.msra.mxu0 %v65
    %258 = vmatprep.subr.mxu0 %v70
    %259 = vmatpush1.msra.mxu0 %v69
    %260 = vmatprep.subr.mxu0 %v74
    %261 = vmatpush1.msra.mxu0 %v73
    %262 = vmatprep.subr.mxu0 %v78
    %263 = vmatpush1.msra.mxu0 %v77
    %264 = vmatprep.subr.mxu0 %v82
    %265 = vmatpush1.msra.mxu0 %v81
    %266 = vmatprep.subr.mxu0 %v86
    %267 = vmatpush1.msra.mxu0 %v85
    %268 = vmatprep.subr.mxu0 %v90
    %269 = vmatpush1.msra.mxu0 %v89
    %270 = vmatprep.subr.mxu0 %v94
    %271 = vmatpush1.msra.mxu0 %v93
    %272 = vmatprep.subr.mxu0 %v98
    %273 = vmatpush1.msra.mxu0 %v97
    %274 = vmatprep.subr.mxu0 %v102
    %275 = vmatpush1.msra.mxu0 %v101
    %276 = vmatprep.subr.mxu0 %v106
    %277 = vmatpush1.msra.mxu0 %v105
    %278 = vmatprep.subr.mxu0 %v110
    %279 = vmatpush1.msra.mxu0 %v109
    %280 = vmatprep.subr.mxu0 %v114
    %281 = vmatpush1.msra.mxu0 %v113
    %282 = vmatprep.subr.mxu0 0.0
    %283 = vmatpush1.msra.mxu0 0.0
    %284 = vmatprep.subr.mxu0 0.0
    %285 = vmatpush1.msra.mxu0 0.0
    %286 = vmatprep.subr.mxu0 0.0
    %287 = vmatpush1.msra.mxu0 0.0
    %288 = vmatprep.subr.mxu0 0.0
    %289 = vmatpush1.msra.mxu0 0.0
    %290 = vmatprep.subr.mxu0 0.0
    %291 = vmatpush1.msra.mxu0 0.0
    %292 = vmatprep.subr.mxu0 0.0
    %293 = vmatpush1.msra.mxu0 0.0
    %294 = vmatprep.subr.mxu0 0.0
    %295 = vmatpush1.msra.mxu0 0.0
    %296 = vmatprep.subr.mxu0 0.0
    %297 = vmatpush1.msra.mxu0 0.0
    %298 = vmatprep.subr.mxu0 0.0
    %299 = vmatpush1.msra.mxu0 0.0
    %300 = vmatprep.subr.mxu0 0.0
    %301 = vmatpush1.msra.mxu0 0.0
    %302 = vmatprep.subr.mxu0 0.0
    %303 = vmatpush1.msra.mxu0 0.0
    %304 = vmatprep.subr.mxu0 0.0
    %305 = vmatpush1.msra.mxu0 0.0
    %306 = vmatprep.subr.mxu0 0.0
    %307 = vmatpush1.msra.mxu0 0.0
    %308 = vmatprep.subr.mxu0 0.0
    %309 = vmatpush1.msra.mxu0 0.0
    %310 = vmatprep.subr.mxu0 0.0
    %311 = vmatpush1.msra.mxu0 0.0
    %312 = vmatprep.subr.mxu0 0.0
    %313 = vmatpush1.msra.mxu0 0.0
    %314 = vmatprep.mubr.f32.mxu0 0.0
    %315 = vmatmul.mubr.f32.gmra.mrb[0].mxu0 %v43
    %v316 = vpop.f32.mrb[0].mxu0
    %v317 = vadd.f32 %v128, %v316
    %v318 = vpop.f32.mrb[0].mxu0
    %v319 = vadd.f32 %v132, %v318
    %320 = vmatprep.mubr.f32.mxu0 0.0
    %321 = vmatmul.mubr.f32.gmra.mrb[0].mxu0 %v44
    %v322 = vpop.f32.mrb[0].mxu0
    %v323 = vadd.f32 %v128, %v322
    %v324 = vpop.f32.mrb[0].mxu0
    %v325 = vadd.f32 %v132, %v324
    %326 = vmatprep.mubr.f32.mxu0 0.0
    %327 = vmatmul.mubr.f32.gmra.mrb[0].mxu0 %v45
    %v328 = vpop.f32.mrb[0].mxu0
    %v329 = vadd.f32 %v128, %v328
    %v330 = vpop.f32.mrb[0].mxu0
    %v331 = vadd.f32 %v132, %v330
    %332 = vmatprep.mubr.f32.mxu0 0.0
    %333 = vmatmul.mubr.f32.gmra.mrb[0].mxu0 %v46
    %v334 = vpop.f32.mrb[0].mxu0
    %v335 = vadd.f32 %v128, %v334
    %v336 = vpop.f32.mrb[0].mxu0
    %v337 = vadd.f32 %v132, %v336
    %338 = vmatprep.mubr.f32.mxu0 0.0
    %339 = vmatmul.mubr.f32.gmra.mrb[0].mxu0 %v47
    %v340 = vpop.f32.mrb[0].mxu0
    %v341 = vadd.f32 %v128, %v340
    %v342 = vpop.f32.mrb[0].mxu0
    %v343 = vadd.f32 %v132, %v342
    %344 = vmatprep.mubr.f32.mxu0 0.0
    %345 = vmatmul.mubr.f32.gmra.mrb[0].mxu0 %v48
    %v346 = vpop.f32.mrb[0].mxu0
    %v347 = vadd.f32 %v128, %v346
    %v348 = vpop.f32.mrb[0].mxu0
    %v349 = vadd.f32 %v132, %v348
    %350 = vmatprep.mubr.f32.mxu0 0.0
    %351 = vmatmul.mubr.f32.gmra.mrb[0].mxu0 %v49
    %v352 = vpop.f32.mrb[0].mxu0
    %v353 = vadd.f32 %v128, %v352
    %v354 = vpop.f32.mrb[0].mxu0
    %v355 = vadd.f32 %v132, %v354
    %356 = vmatprep.mubr.f32.mxu0 0.0
    %357 = vmatmul.mubr.f32.gmra.mrb[0].mxu0 %v50
    %v358 = vpop.f32.mrb[0].mxu0
    %v359 = vadd.f32 %v128, %v358
    %v360 = vpop.f32.mrb[0].mxu0
    %v361 = vadd.f32 %v132, %v360
    %362 = vdwg.mxu0
    %v363 = vtanh.pop %v204
    %v364 = vtanh.pop %v206
    %v365 = vtanh.pop %v317
    %v366 = vtanh.pop %v319
    %v367 = vtanh.pop %v210
    %v368 = vtanh.pop %v212
    %v369 = vtanh.pop %v323
    %v370 = vtanh.pop %v325
    %v371 = vtanh.pop %v216
    %v372 = vtanh.pop %v218
    %v373 = vtanh.pop %v329
    %v374 = vtanh.pop %v331
    %v375 = vtanh.pop %v222
    %v376 = vtanh.pop %v224
    %v377 = vtanh.pop %v335
    %v378 = vtanh.pop %v337
    %v379 = vtanh.pop %v228
    %v380 = vtanh.pop %v230
    %v381 = vtanh.pop %v341
    %v382 = vtanh.pop %v343
    %v383 = vtanh.pop %v234
    %v384 = vtanh.pop %v236
    %v385 = vtanh.pop %v347
    %v386 = vtanh.pop %v349
    %v387 = vtanh.pop %v240
    %v388 = vtanh.pop %v242
    %v389 = vtanh.pop %v353
    %v390 = vtanh.pop %v355
    %v391 = vtanh.pop %v246
    %v392 = vtanh.pop %v248
    %v393 = vtanh.pop %v359
    %v394 = vtanh.pop %v361
    %v395 = vadd.f32 %v363, %v367
    %v396 = vadd.f32 %v395, %v371
    %v397 = vadd.f32 %v396, %v375
    %v398 = vadd.f32 %v397, %v379
    %v399 = vadd.f32 %v398, %v383
    %v400 = vadd.f32 %v399, %v387
    %v401 = vadd.f32 %v400, %v391
    %v402 = vrot.slane %v401, 4
    %v403 = vadd.f32 %v401, %v402
    %v404 = vrot.slane %v403, 2
    %v405 = vadd.f32 %v403, %v404
    %v406 = vrot.slane %v405, 1
    %v407 = vadd.f32 %v405, %v406
    %v408 = vadd.f32 %v364, %v368
    %v409 = vadd.f32 %v408, %v372
    %v410 = vadd.f32 %v409, %v376
    %v411 = vadd.f32 %v410, %v380
    %v412 = vadd.f32 %v411, %v384
    %v413 = vadd.f32 %v412, %v388
    %v414 = vadd.f32 %v413, %v392
    %v415 = vrot.slane %v414, 4
    %v416 = vadd.f32 %v414, %v415
    %v417 = vrot.slane %v416, 2
    %v418 = vadd.f32 %v416, %v417
    %v419 = vrot.slane %v418, 1
    %v420 = vadd.f32 %v418, %v419
    %v421 = vadd.f32 %v365, %v369
    %v422 = vadd.f32 %v421, %v373
    %v423 = vadd.f32 %v422, %v377
    %v424 = vadd.f32 %v423, %v381
    %v425 = vadd.f32 %v424, %v385
    %v426 = vadd.f32 %v425, %v389
    %v427 = vadd.f32 %v426, %v393
    %v428 = vrot.slane %v427, 4
    %v429 = vadd.f32 %v427, %v428
    %v430 = vrot.slane %v429, 2
    %v431 = vadd.f32 %v429, %v430
    %v432 = vrot.slane %v431, 1
    %v433 = vadd.f32 %v431, %v432
    %v434 = vadd.f32 %v366, %v370
    %v435 = vadd.f32 %v434, %v374
    %v436 = vadd.f32 %v435, %v378
    %v437 = vadd.f32 %v436, %v382
    %v438 = vadd.f32 %v437, %v386
    %v439 = vadd.f32 %v438, %v390
    %v440 = vadd.f32 %v439, %v394
    %v441 = vrot.slane %v440, 4
    %v442 = vadd.f32 %v440, %v441
    %v443 = vrot.slane %v442, 2
    %v444 = vadd.f32 %v442, %v443
    %v445 = vrot.slane %v444, 1
    %v446 = vadd.f32 %v444, %v445
    %v451 = vcombine.low %v407, %v420
    %v452 = vcombine.low %v433, %v446
    %v454 = vunpack.c.l.s4 1966171168
    %v455 = vunpack.c.0.s8 %v454
    %v456 = vlaneseq
    %v457 = vshrl.u32 %v456, 7
    %v458 = vsub.s32 %v455, %v457
    %v459 = vrot.slane %v451, %v458
    %v461 = vunpack.c.l.s4 1966171168
    %v462 = vunpack.c.0.s8 %v461
    %v463 = vlaneseq
    %v464 = vshrl.u32 %v463, 7
    %v465 = vsub.s32 %v462, %v464
    %v466 = vrot.slane %v452, %v465
    %v467 = vcombine.low %v459, %v466
    %v469 = vunpack.c.l.s4 1966171168
    %v470 = vunpack.c.0.s8 %v469
    %v471 = vlaneseq
    %v472 = vshrl.u32 %v471, 7
    %v473 = vsub.s32 %v470, %v472
    %v474 = vrot.slane %v467, %v473
    %v476 = vlaneseq
    %vm477 = vcmp.ge.s32.totalorder %v476, 0
    %vm478 = vcmp.lt.s32.totalorder %v476, 512
    %vm479 = vmand %vm477, %vm478
    %480 = vst.msk [vmem:[#allocation7] sm:$0xf] %vm479, %v474
    // Predicated region
    $region22: #{tpu_custom_call.1} parent=1 // pred_check
      _
    $region23: #{tpu_custom_call.1} parent=1 // pred_check_branch
      %482 = sbr.rel (0) target = $region25
    $region24: #{tpu_custom_call.1} parent=1 // pred_region
      %s484 = ssub.s32 64, 64
      %485 = vsyncadd [#allocation4], %s484
      %s487 = sshll.u32 [#allocation7], 4
      %s488 = int_to_ptr.vmem [resolvable:$true] %s487
      %490 = dma.vmem_to_hbm [thread:$0]  %s488, 64, %s3, [#allocation4]
    $region25: #{tpu_custom_call.1} parent=1 // pred_fallthru
      _
    // Predicated region
    $region26: #{tpu_custom_call.1} parent=1 // pred_check
      _
    $region27: #{tpu_custom_call.1} parent=1 // pred_check_branch
      %492 = sbr.rel (0) target = $region29
    $region28: #{tpu_custom_call.1} parent=1 // pred_region
      %493 = dma.done [#allocation4], 64
    $region29: #{tpu_custom_call.1} parent=1 // pred_fallthru
      _
    %494 = vsyncpa [#allocation3], 1
    %495 = vsyncpa [#allocation6], 1
    %496 = vsyncpa [#allocation4], 1

</llo_original>
